<compile_context>
chip_gen: v7x
topology: tpu7x:2x2x1
jax: 0.10.0
libtpu: 0.0.40
codegen_flags: <defaults>
</compile_context>

<pallas_src>
import functools

import jax
import jax.numpy as jnp
from jax.experimental import pallas as pl
from jax.experimental.pallas import tpu as pltpu

_LANE_WIDTHS = (1024, 512, 256, 128)   # candidate lane-dense last dims
_TARGET_TILE_BYTES = 4 << 20           # ~4 MiB of x per grid step (dtype-aware)
_VMEM_LIMIT_BYTES = 32 << 20           # covers x+y+mask double-buffered everywhere


def _choose_layout(total, itemsize):
    """Lane-dense (R, C) slab covering the largest C-divisible prefix + row tile.

    Returns (R, C, row_tile, tail) where tail = total - R*C (< 128) is handled
    outside the kernel with a tiny jnp multiply (no full-array pad/slice).
    """
    C = 128
    for cand in _LANE_WIDTHS:
        if total >= cand and total % cand == 0:
            C = cand
            break
    R = total // C
    tail = total - R * C
    if R == 0:
        return 0, C, 0, tail
    # Rows per ~_TARGET_TILE_BYTES block of x; multiple of 8 (sublane tiling).
    t = max(8, (_TARGET_TILE_BYTES // (C * itemsize)) // 8 * 8)
    if R <= t:
        # For multi-MiB tensors keep >=2 row tiles so the grid axis can split
        # across v7x's two TensorCores; tiny tensors stay a single full block.
        if R >= 16 and R * C * itemsize >= (2 << 20):
            half = -(-R // 2)
            row_tile = -(-half // 8) * 8
        else:
            row_tile = R                # block equals full dim -> always legal
    else:
        row_tile = t
    return R, C, row_tile, tail


# ---------------------------------------------------------------------------
# Hot-path kernel: y = where(mask != 0, x * 1/(1-p), 0), scale applied in f32.
# Pure streaming VPU work under the HBM roofline; no MXU.
# ---------------------------------------------------------------------------
def _apply_kernel(x_ref, m_ref, o_ref, *, scale):
    xf = x_ref[...].astype(jnp.float32) * scale          # single wide upcast-mul
    keep = m_ref[...].astype(jnp.float32) != 0.0          # int8 {0,1} -> predicate
    o_ref[...] = jnp.where(keep, xf, 0.0).astype(o_ref.dtype)


def _build_apply_call(R, C, row_tile, dtype, p):
    """Build the pallas_call once per (shape, dtype) layout."""
    grid = (pl.cdiv(R, row_tile),)
    compiler_params = None
    if jax.default_backend() == "tpu":
        compiler_params = pltpu.CompilerParams(
            # Megacore split of the row-tile axis (2 TCs on v7x); harmless on
            # single-TC chips.
            dimension_semantics=("parallel",),
            vmem_limit_bytes=_VMEM_LIMIT_BYTES,
        )
    return pl.pallas_call(
        functools.partial(_apply_kernel, scale=1.0 / (1.0 - p)),
        out_shape=jax.ShapeDtypeStruct((R, C), dtype),
        grid=grid,
        in_specs=[pl.BlockSpec((row_tile, C), lambda i: (i, 0)),
                  pl.BlockSpec((row_tile, C), lambda i: (i, 0))],
        out_specs=pl.BlockSpec((row_tile, C), lambda i: (i, 0)),
        compiler_params=compiler_params,
    )


# ---------------------------------------------------------------------------
# Python wrapper mirroring the stateful PyTorch module.
# ---------------------------------------------------------------------------
class DropoutPallas:
    def __init__(self, p=0.5, dropout_spikes=False, seed=1234):
        assert 0 < p < 1
        self.p = p
        # dropout_spikes only selects a sparse-aware torch path; the math is
        # identical, so the same Pallas kernel serves both.
        self.dropout_spikes = dropout_spikes
        self.training = True
        self.mask = None            # persistent flat int8 {0,1} keep-mask
        self._key = jax.random.PRNGKey(seed)
        self._sig = None            # (shape, dtype) the mask/step were built for
        self._mask_main = None      # (R, C) int8 view of the prefix
        self._mask_tail = None      # (<128,) int8 tail, or None
        self._step = None           # cached jitted hot-path callable

    def create_mask(self, x):
        total = int(x.size)
        itemsize = jnp.dtype(x.dtype).itemsize
        R, C, row_tile, tail = _choose_layout(total, itemsize)
        self._sig = (x.shape, x.dtype)

        # Cold path, once per simulation: keep w.p. (1-p); stored as int8 {0,1}.
        self._key, sub = jax.random.split(self._key)
        keep = jax.random.bernoulli(sub, 1.0 - self.p, (total,)).astype(jnp.int8)
        self.mask = keep
        self._mask_main = keep[:R * C].reshape(R, C) if R else None
        self._mask_tail = keep[R * C:] if tail else None

        scale = 1.0 / (1.0 - self.p)
        shape, dtype = x.shape, x.dtype
        apply_call = _build_apply_call(R, C, row_tile, dtype, self.p) if R else None

        def step(xx, mask_main, mask_tail):
            if tail == 0:
                # Common case: copy-free reshape around the kernel.
                return apply_call(xx.reshape(R, C), mask_main).reshape(shape)
            flat = xx.reshape(-1)
            if R:
                y_main = apply_call(flat[:R * C].reshape(R, C),
                                    mask_main).reshape(-1)
            else:
                y_main = flat[:0]
            xt = flat[R * C:]
            y_tail = jnp.where(mask_tail != 0,
                               xt.astype(jnp.float32) * scale,
                               0.0).astype(dtype)
            return jnp.concatenate([y_main, y_tail]).reshape(shape)

        # One cached executable per (shape, dtype); per-timestep forward() is
        # a single jitted dispatch (reshapes are metadata-only under jit).
        self._step = jax.jit(step)

    def forward(self, x):
        if not self.training:
            return x
        if self.mask is None:
            self.create_mask(x)
        elif self._sig != (x.shape, x.dtype):
            raise ValueError(
                f"persistent dropout mask was built for {self._sig}, got "
                f"{(x.shape, x.dtype)}; call reset() first")
        return self._step(x, self._mask_main, self._mask_tail)

    __call__ = forward

    def reset(self):
        self.mask = None
        self._mask_main = None
        self._mask_tail = None
        self._step = None
        self._sig = None


if __name__ == "__main__":
    key = jax.random.PRNGKey(0)
    x = jax.random.normal(key, (2, 4, 16, 16), dtype=jnp.float32)  # NCHW

    layer = DropoutPallas(p=0.5, dropout_spikes=False)

    y1 = layer.forward(x)
    jax.block_until_ready(y1)

    # Second forward (next timestep of the same simulation): the mask — and
    # hence the set of zeroed positions — must be unchanged.
    y2 = layer.forward(x * 2.0)
    jax.block_until_ready(y2)

    z1 = (y1 == 0.0)
    z2 = (y2 == 0.0)
    assert bool(jnp.all(z1 == z2)), "persistent-mask property violated"

    # Non-zeroed elements are scaled by 1/(1-p).
    scale = 1.0 / (1.0 - layer.p)
    assert bool(jnp.allclose(jnp.where(z1, 0.0, y1),
                             jnp.where(z1, 0.0, x * scale),
                             rtol=1e-6, atol=1e-6))

    # Eval mode is identity.
    layer.training = False
    y3 = layer.forward(x)
    assert bool(jnp.allclose(y3, x))

    # reset() clears the persistent state.
    layer.training = True
    layer.reset()
    assert layer.mask is None

    print("KERNEL_OK")
</pallas_src>

<mosaic_0001>
module attributes {stable_mosaic.version = 11 : i64} {
  func.func @_apply_kernel(%arg0: i32, %arg1: memref<2x1024xf32, #tpu.memory_space<vmem>>, %arg2: memref<2x1024xi8, #tpu.memory_space<vmem>>, %arg3: memref<2x1024xf32, #tpu.memory_space<vmem>>) attributes {dimension_semantics = [#tpu.dimension_semantics<arbitrary>], iteration_bounds = array<i64: 1>, scalar_prefetch = 0 : i64, scratch_operands = 0 : i64, tpu.core_type = #tpu.core_type<tc>, window_params = [{transform_indices = @transform_0, window_bounds = array<i64: 2, 1024>}, {transform_indices = @transform_1, window_bounds = array<i64: 2, 1024>}, {transform_indices = @transform_2, window_bounds = array<i64: 2, 1024>}]} {
    %c0 = arith.constant 0 : index
    %c0_0 = arith.constant 0 : index
    %0 = vector.load %arg1[%c0, %c0_0] : memref<2x1024xf32, #tpu.memory_space<vmem>>, vector<2x1024xf32>
    %cst = arith.constant 2.000000e+00 : f32
    %1 = vector.broadcast %cst : f32 to vector<2x1024xf32>
    %2 = arith.mulf %0, %1 : vector<2x1024xf32>
    %c0_1 = arith.constant 0 : index
    %c0_2 = arith.constant 0 : index
    %3 = vector.load %arg2[%c0_1, %c0_2] : memref<2x1024xi8, #tpu.memory_space<vmem>>, vector<2x1024xi8>
    %4 = arith.sitofp %3 : vector<2x1024xi8> to vector<2x1024xf32>
    %cst_3 = arith.constant 0.000000e+00 : f32
    %5 = vector.broadcast %cst_3 : f32 to vector<2x1024xf32>
    %6 = arith.cmpf one, %4, %5 : vector<2x1024xf32>
    %cst_4 = arith.constant 0.000000e+00 : f32
    %7 = vector.broadcast %cst_4 : f32 to vector<2x1024xf32>
    %8 = arith.select %6, %2, %7 : vector<2x1024xi1>, vector<2x1024xf32>
    %c0_5 = arith.constant 0 : index
    %c0_6 = arith.constant 0 : index
    %9 = vector.load %arg3[%c0_5, %c0_6] : memref<2x1024xf32, #tpu.memory_space<vmem>>, vector<2x1024xf32>
    tpu.vector_store %arg3[%c0_5, %c0_6], %8 {strides = array<i32>} : memref<2x1024xf32, #tpu.memory_space<vmem>>, vector<2x1024xf32>,
    return
  }
  func.func @transform_0(%arg0: i32) -> (i32, i32) {
    %c0_i32 = arith.constant 0 : i32
    %c0_i32_0 = arith.constant 0 : i32
    return %arg0, %c0_i32 : i32, i32
  }
  func.func @transform_1(%arg0: i32) -> (i32, i32) {
    %c0_i32 = arith.constant 0 : i32
    %c0_i32_0 = arith.constant 0 : i32
    return %arg0, %c0_i32 : i32, i32
  }
  func.func @transform_2(%arg0: i32) -> (i32, i32) {
    %c0_i32 = arith.constant 0 : i32
    %c0_i32_0 = arith.constant 0 : i32
    return %arg0, %c0_i32 : i32, i32
  }
}

</mosaic_0001>

<llo_original>
// kernel: step.1
$region0: #{step.1}
  #allocation0 [shape = 'u32[]', space=smem, size = 0x4, offset = 0x4, fixed_abs, tag = 'smem constant byte address 0x4 - core index']
  #allocation1 [shape = 'u32[144,128]{1,0:T(1,128)}', space=vmem, size = 0x12000, scoped, tag = 'internal scratch']
  %s0 = inlined_call_operand.vmem [shape: f32[2,1024], index: 0, kind: input, shape index: {}]
  %s1 = inlined_call_operand.vmem [shape: s8[2,1024], index: 1, kind: input, shape index: {}]
  %s2 = inlined_call_operand.vmem [shape: f32[2,1024], index: 2, kind: output, shape index: {}]
  %s3 = sld [smem:[#allocation0]]
  $region18: #{step.1} parent=0
    _
  %s5 = ssub.s32 1, %s3
  %s6 = scalar_select 0, %s5, %s3
  // Predicated region
  $region2: #{step.1} parent=0 // pred_check
    _
  $region3: #{step.1} parent=0 // pred_check_branch
    %8 = sbr.rel (0) target = $region5
  $region4: #{step.1} parent=0 // pred_region
    _
  $region5: #{step.1} parent=0 // pred_fallthru
    _
  // Predicated region
  $region6: #{step.1} parent=0 // pred_check
    _
  $region7: #{step.1} parent=0 // pred_check_branch
    %10 = sbr.rel (0) target = $region9
  $region8: #{step.1} parent=0 // pred_region
    _
  $region9: #{step.1} parent=0 // pred_fallthru
    _
  %v11 = vld [vmem:[%s0] sm:$0xff]
  %v12 = vld [vmem:[%s0 + $0x8] sm:$0xff]
  %v13 = vmul.f32 %v11, 2.0
  %v14 = vmul.f32 %v12, 2.0
  %v15 = vld [vmem:[%s1] sm:$0xff]
  %v16 = vunpack.c.0.s8 %v15
  %v17 = vunpack.c.1.s8 %v15
  %v18 = vunpack.c.2.s8 %v15
  %v19 = vunpack.c.3.s8 %v15
  %v20 = vcvt.s32.f32 %v16
  %v21 = vcvt.s32.f32 %v17
  %v22 = vcvt.s32.f32 %v18
  %v23 = vcvt.s32.f32 %v19
  %vm24 = vcmp.ne.f32.partialorder %v20, 0.0
  %vm25 = vcmp.ne.f32.partialorder %v21, 0.0
  %vm26 = vcmp.ne.f32.partialorder %v22, 0.0
  %vm27 = vcmp.ne.f32.partialorder %v23, 0.0
  %v30 = vcombine.high %v13, %v13
  %v32 = vunpack.c.l.s4 1983009808
  %v33 = vunpack.c.0.s8 %v32
  %v34 = vlaneseq
  %v35 = vshrl.u32 %v34, 7
  %v36 = vsub.s32 %v33, %v35
  %v37 = vrot.slane %v13, %v36
  %v39 = vunpack.c.l.s4 1983009808
  %v40 = vunpack.c.0.s8 %v39
  %v41 = vlaneseq
  %v42 = vshrl.u32 %v41, 7
  %v43 = vsub.s32 %v40, %v42
  %v44 = vrot.slane %v30, %v43
  %v45 = vcombine.high %v14, %v14
  %v47 = vunpack.c.l.s4 1983009808
  %v48 = vunpack.c.0.s8 %v47
  %v49 = vlaneseq
  %v50 = vshrl.u32 %v49, 7
  %v51 = vsub.s32 %v48, %v50
  %v52 = vrot.slane %v14, %v51
  %v54 = vunpack.c.l.s4 1983009808
  %v55 = vunpack.c.0.s8 %v54
  %v56 = vlaneseq
  %v57 = vshrl.u32 %v56, 7
  %v58 = vsub.s32 %v55, %v57
  %v59 = vrot.slane %v45, %v58
  %v64 = vsel %vm24, %v37, 0.0
  %v65 = vsel %vm25, %v44, 0.0
  %v66 = vsel %vm26, %v52, 0.0
  %v67 = vsel %vm27, %v59, 0.0
  %v73 = vunpack.c.l.s4 1983009808
  %v74 = vunpack.c.0.s8 %v73
  %v75 = vlaneseq
  %v76 = vshrl.u32 %v75, 7
  %v77 = vsub.s32 %v74, %v76
  %v78 = vrot.slane %v64, %v77
  %v80 = vunpack.c.l.s4 1983009808
  %v81 = vunpack.c.0.s8 %v80
  %v82 = vlaneseq
  %v83 = vshrl.u32 %v82, 7
  %v84 = vsub.s32 %v81, %v83
  %v85 = vrot.slane %v65, %v84
  %v86 = vcombine.low %v78, %v85
  %v88 = vunpack.c.l.s4 1983009808
  %v89 = vunpack.c.0.s8 %v88
  %v90 = vlaneseq
  %v91 = vshrl.u32 %v90, 7
  %v92 = vsub.s32 %v89, %v91
  %v93 = vrot.slane %v66, %v92
  %v95 = vunpack.c.l.s4 1983009808
  %v96 = vunpack.c.0.s8 %v95
  %v97 = vlaneseq
  %v98 = vshrl.u32 %v97, 7
  %v99 = vsub.s32 %v96, %v98
  %v100 = vrot.slane %v67, %v99
  %v101 = vcombine.low %v93, %v100
  %104 = vst [vmem:[%s2] sm:$0xff] %v86
  %105 = vst [vmem:[%s2 + $0x8] sm:$0xff] %v101
  // Predicated region
  $region10: #{step.1} parent=0 // pred_check
    _
  $region11: #{step.1} parent=0 // pred_check_branch
    %107 = sbr.rel (0) target = $region13
  $region12: #{step.1} parent=0 // pred_region
    _
  $region13: #{step.1} parent=0 // pred_fallthru
    _
  // Predicated region
  $region14: #{step.1} parent=0 // pred_check
    _
  $region15: #{step.1} parent=0 // pred_check_branch
    %109 = sbr.rel (0) target = $region17
  $region16: #{step.1} parent=0 // pred_region
    _
  $region17: #{step.1} parent=0 // pred_fallthru
    _

</llo_original>
